<compile_context>
chip_gen: v5e
topology: v5e:2x2
jax: 0.10.0
libtpu: 0.0.40
codegen_flags: <defaults>
</compile_context>

<pallas_src>
import math

import jax
import jax.numpy as jnp
from jax.experimental import pallas as pl
from jax.experimental.pallas import tpu as pltpu


def _round_up(x, m):
    return ((x + m - 1) // m) * m


def _choose_time_chunk(T, target=16):
    """Largest divisor of T that is <= target (T-chunk streamed per grid step)."""
    best = 1
    for d in range(1, min(T, target) + 1):
        if T % d == 0:
            best = d
    return best


# -----------------------------------------------------------------------------
# Pallas kernels
# -----------------------------------------------------------------------------
def _proj_kernel(x_ref, w_ref, b_ref, out_ref):
    """Layer-0 input->gates projection (both directions at once).

    x  : (Mt, E)    row tile of the time-major flattened input
    w  : (E, 8Hp)   [Wih_fwd^T | Wih_bwd^T] bf16
    b  : (1, 8Hp)   (b_ih + b_hh) for both directions, f32
    out: (Mt, 8Hp)  bf16 pre-activations (before the recurrent h@Whh term)
    """
    x = x_ref[...].astype(jnp.bfloat16)
    acc = jnp.dot(x, w_ref[...], preferred_element_type=jnp.float32)
    out_ref[...] = (acc + b_ref[...]).astype(out_ref.dtype)


def _proj2_kernel(xf_ref, xb_ref, wf_ref, wb_ref, b_ref, out_ref):
    """Layer>=1 projection: consumes the previous layer's fwd/bwd bf16 outputs
    separately so the bidirectional concat is never materialized."""
    acc = jnp.dot(xf_ref[...].astype(jnp.bfloat16), wf_ref[...],
                  preferred_element_type=jnp.float32)
    acc = acc + jnp.dot(xb_ref[...].astype(jnp.bfloat16), wb_ref[...],
                        preferred_element_type=jnp.float32)
    out_ref[...] = (acc + b_ref[...]).astype(out_ref.dtype)


def _make_bilstm_layer_kernel(T, tc, Hp, last_layer):
    """Fused bidirectional LSTM layer; T is streamed in chunks of tc timesteps.

    Grid = (batch_tiles, T//tc); the T-chunk axis is 'arbitrary' and carries
    h/c (and pooling) state in VMEM scratch.

    gf_ref : (tc, Bt, 4Hp) bf16  fwd gates, chunk k      (lanes [0:4Hp])
    gb_ref : (tc, Bt, 4Hp) bf16  bwd gates, chunk nt-1-k (lanes [4Hp:8Hp])
    whh_ref: (2, Hp, 4Hp)  bf16  recurrent weights, [0]=fwd, [1]=bwd
    outputs: last layer -> (4, Bt, Hp) pooled [max_f, mean_f, max_b, mean_b]
             else       -> of (tc, Bt, Hp) bf16 + ob (tc, Bt, Hp) bf16
    """
    nt = T // tc
    inv_t = 1.0 / float(T)
    neg_big = float(jnp.finfo(jnp.float32).min)

    def kernel(gf_ref, gb_ref, whh_ref, *rest):
        if last_layer:
            out_ref, h_scr, c_scr, mx_scr, sm_scr = rest
        else:
            of_ref, ob_ref, h_scr, c_scr = rest

        k = pl.program_id(1)

        @pl.when(k == 0)
        def _init():
            # PyTorch module feeds zero-initialized (h0, c0).
            h_scr[...] = jnp.zeros_like(h_scr)
            c_scr[...] = jnp.zeros_like(c_scr)
            if last_layer:
                mx_scr[...] = jnp.full_like(mx_scr, neg_big)
                sm_scr[...] = jnp.zeros_like(sm_scr)

        # Recurrent weights stay resident across the whole chunk.
        whh_f = whh_ref[0]            # (Hp, 4Hp) bf16
        whh_b = whh_ref[1]

        def cell(g_pre, h_prev, c_prev, whh):
            g = g_pre.astype(jnp.float32) + jnp.dot(
                h_prev.astype(jnp.bfloat16), whh,
                preferred_element_type=jnp.float32)
            i = jax.nn.sigmoid(g[:, 0 * Hp:1 * Hp])   # PyTorch order i,f,g,o
            f = jax.nn.sigmoid(g[:, 1 * Hp:2 * Hp])
            gg = jnp.tanh(g[:, 2 * Hp:3 * Hp])
            o = jax.nn.sigmoid(g[:, 3 * Hp:4 * Hp])
            c_new = f * c_prev + i * gg
            h_new = o * jnp.tanh(c_new)
            return h_new, c_new

        def step(j, carry):
            h_f, c_f = cell(gf_ref[j], h_scr[0], c_scr[0], whh_f)
            h_b, c_b = cell(gb_ref[tc - 1 - j], h_scr[1], c_scr[1], whh_b)
            h_scr[0] = h_f
            c_scr[0] = c_f
            h_scr[1] = h_b
            c_scr[1] = c_b
            if last_layer:
                # Fused max/mean pooling (order-independent over time).
                mx_scr[0] = jnp.maximum(mx_scr[0], h_f)
                sm_scr[0] = sm_scr[0] + h_f
                mx_scr[1] = jnp.maximum(mx_scr[1], h_b)
                sm_scr[1] = sm_scr[1] + h_b
            else:
                of_ref[j] = h_f.astype(of_ref.dtype)
                ob_ref[tc - 1 - j] = h_b.astype(ob_ref.dtype)
            return carry

        jax.lax.fori_loop(0, tc, step, 0, unroll=True)

        if last_layer:
            @pl.when(k == nt - 1)
            def _finalize():
                out_ref[0] = mx_scr[0]            # max  (fwd)
                out_ref[1] = sm_scr[0] * inv_t    # mean (fwd)
                out_ref[2] = mx_scr[1]            # max  (bwd)
                out_ref[3] = sm_scr[1] * inv_t    # mean (bwd)

    return kernel


def _fc_kernel(p1_ref, p2_ref, w1_ref, w2_ref, b_ref, out_ref):
    """Final Linear(8H -> 1) as a VPU multiply + lane reduction.

    p1, p2: (4, bt, Hp) pooled features of the s1 / s2 half of the batch
    w1, w2: (4, 1, Hp)  matching fc-weight slices (zero in padded lanes)
    b     : (1, 1)
    out   : (bt, 1)
    """
    t1 = jnp.sum(p1_ref[...] * w1_ref[...], axis=-1, keepdims=True)  # (4,bt,1)
    t2 = jnp.sum(p2_ref[...] * w2_ref[...], axis=-1, keepdims=True)
    out_ref[...] = jnp.sum(t1 + t2, axis=0) + b_ref[...]             # (bt,1)


# -----------------------------------------------------------------------------
# pallas_call wrappers
# -----------------------------------------------------------------------------
def _input_projection(x2d, w, b):
    M, D = x2d.shape
    G = w.shape[-1]
    mt = M if M <= 512 else 512
    Mp = _round_up(M, mt)
    if Mp != M:
        x2d = jnp.pad(x2d, ((0, Mp - M), (0, 0)))
    out = pl.pallas_call(
        _proj_kernel,
        out_shape=jax.ShapeDtypeStruct((Mp, G), jnp.bfloat16),
        grid_spec=pltpu.PrefetchScalarGridSpec(
            num_scalar_prefetch=0,
            grid=(Mp // mt,),
            in_specs=[pl.BlockSpec((mt, D), lambda i: (i, 0)),
                      pl.BlockSpec((D, G), lambda i: (0, 0)),
                      pl.BlockSpec((1, G), lambda i: (0, 0))],
            out_specs=pl.BlockSpec((mt, G), lambda i: (i, 0))),
        compiler_params=pltpu.CompilerParams(
            dimension_semantics=("parallel",)),
    )(x2d, w, b)
    return out[:M] if Mp != M else out


def _input_projection2(xf2d, xb2d, wf, wb, b):
    M, Hp = xf2d.shape
    G = wf.shape[-1]
    mt = M if M <= 512 else 512
    Mp = _round_up(M, mt)
    if Mp != M:
        xf2d = jnp.pad(xf2d, ((0, Mp - M), (0, 0)))
        xb2d = jnp.pad(xb2d, ((0, Mp - M), (0, 0)))
    out = pl.pallas_call(
        _proj2_kernel,
        out_shape=jax.ShapeDtypeStruct((Mp, G), jnp.bfloat16),
        grid_spec=pltpu.PrefetchScalarGridSpec(
            num_scalar_prefetch=0,
            grid=(Mp // mt,),
            in_specs=[pl.BlockSpec((mt, Hp), lambda i: (i, 0)),
                      pl.BlockSpec((mt, Hp), lambda i: (i, 0)),
                      pl.BlockSpec((Hp, G), lambda i: (0, 0)),
                      pl.BlockSpec((Hp, G), lambda i: (0, 0)),
                      pl.BlockSpec((1, G), lambda i: (0, 0))],
            out_specs=pl.BlockSpec((mt, G), lambda i: (i, 0))),
        compiler_params=pltpu.CompilerParams(
            dimension_semantics=("parallel",)),
    )(xf2d, xb2d, wf, wb, b)
    return out[:M] if Mp != M else out


def _bilstm_layer(gates, whh_stack, *, Hp, T, last_layer, batch_tile, t_chunk):
    Tg, Bp, G2 = gates.shape
    assert Tg == T and G2 == 8 * Hp
    assert Bp % batch_tile == 0 and T % t_chunk == 0
    nb = Bp // batch_tile
    nt = T // t_chunk
    kernel = _make_bilstm_layer_kernel(T, t_chunk, Hp, last_layer)

    # Same gates array is passed twice: a forward stream and a time-reversed
    # stream offset by 4Hp lanes (bwd direction).
    gate_spec_f = pl.BlockSpec((t_chunk, batch_tile, 4 * Hp),
                               lambda b, k: (k, b, 0))
    gate_spec_b = pl.BlockSpec((t_chunk, batch_tile, 4 * Hp),
                               lambda b, k: (nt - 1 - k, b, 1))
    whh_spec = pl.BlockSpec((2, Hp, 4 * Hp), lambda b, k: (0, 0, 0))

    scratch = [pltpu.VMEM((2, batch_tile, Hp), jnp.float32),   # h
               pltpu.VMEM((2, batch_tile, Hp), jnp.float32)]   # c

    if last_layer:
        out_shape = jax.ShapeDtypeStruct((4, Bp, Hp), jnp.float32)
        out_specs = pl.BlockSpec((4, batch_tile, Hp), lambda b, k: (0, b, 0))
        scratch += [pltpu.VMEM((2, batch_tile, Hp), jnp.float32),   # running max
                    pltpu.VMEM((2, batch_tile, Hp), jnp.float32)]   # running sum
    else:
        out_shape = (jax.ShapeDtypeStruct((T, Bp, Hp), jnp.bfloat16),
                     jax.ShapeDtypeStruct((T, Bp, Hp), jnp.bfloat16))
        out_specs = [pl.BlockSpec((t_chunk, batch_tile, Hp),
                                  lambda b, k: (k, b, 0)),
                     pl.BlockSpec((t_chunk, batch_tile, Hp),
                                  lambda b, k: (nt - 1 - k, b, 0))]

    # Rough resident-VMEM estimate (double-buffered blocks + scratch); only
    # override the scoped default when a large config actually needs it.
    blk = 2 * 2 * (t_chunk * batch_tile * 4 * Hp * 2)          # gates (2 dirs)
    blk += 2 * (2 * Hp * 4 * Hp * 2)                           # whh
    blk += (6 if last_layer else 4) * (batch_tile * Hp * 4)    # scratch
    if last_layer:
        blk += 2 * (4 * batch_tile * Hp * 4)
    else:
        blk += 2 * 2 * (t_chunk * batch_tile * Hp * 2)
    vmem_limit = None
    if blk > 12 * 1024 * 1024:
        vmem_limit = int(min(2 * blk, 96 * 1024 * 1024))

    return pl.pallas_call(
        kernel,
        out_shape=out_shape,
        grid_spec=pltpu.PrefetchScalarGridSpec(
            num_scalar_prefetch=0,
            grid=(nb, nt),
            in_specs=[gate_spec_f, gate_spec_b, whh_spec],
            out_specs=out_specs,
            scratch_shapes=scratch),
        compiler_params=pltpu.CompilerParams(
            dimension_semantics=("parallel", "arbitrary"),
            vmem_limit_bytes=vmem_limit),
    )(gates, gates, whh_stack)


def _final_fc(pooled, w1, w2, b, *, Bh, bt, Hp):
    nbh = Bh // bt
    return pl.pallas_call(
        _fc_kernel,
        out_shape=jax.ShapeDtypeStruct((Bh, 1), jnp.float32),
        grid_spec=pltpu.PrefetchScalarGridSpec(
            num_scalar_prefetch=0,
            grid=(nbh,),
            in_specs=[pl.BlockSpec((4, bt, Hp), lambda i: (0, i, 0)),
                      pl.BlockSpec((4, bt, Hp), lambda i: (0, nbh + i, 0)),
                      pl.BlockSpec((4, 1, Hp), lambda i: (0, 0, 0)),
                      pl.BlockSpec((4, 1, Hp), lambda i: (0, 0, 0)),
                      pl.BlockSpec((1, 1), lambda i: (0, 0))],
            out_specs=pl.BlockSpec((bt, 1), lambda i: (i, 0))),
        compiler_params=pltpu.CompilerParams(
            dimension_semantics=("parallel",)),
    )(pooled, pooled, w1, w2, b)


def bilstm_forward(params, s1, s2):
    Hp = params["Hp"]
    B, T = s1.shape
    n_layers = len(params["layers"])

    # Both towers share the LSTM weights -> run them as one merged batch.
    Bh = _round_up(max(B, 8), 8)
    bt = Bh if Bh <= 128 else 128
    Bh = _round_up(Bh, bt)
    Bp = 2 * Bh
    s_all = jnp.concatenate([jnp.pad(s1, ((0, Bh - B), (0, 0))),
                             jnp.pad(s2, ((0, Bh - B), (0, 0)))], axis=0)

    tc = _choose_time_chunk(T, 16)

    # TODO(synk): the embedding row gather stays in plain XLA (jnp.take); it is
    # done time-major directly so no (B,T,E) transpose copy is made.
    x = jnp.take(params["embedding_bf16"], s_all.T, axis=0)   # (T, Bp, E) bf16

    M = T * Bp
    cur = None
    for li, layer in enumerate(params["layers"]):
        if li == 0:
            gates = _input_projection(x.reshape(M, x.shape[-1]),
                                      layer["wih_cat"], layer["b_cat"])
        else:
            of, ob = cur
            gates = _input_projection2(of.reshape(M, Hp), ob.reshape(M, Hp),
                                       layer["wih_f_rows"],
                                       layer["wih_b_rows"], layer["b_cat"])
        gates = gates.reshape(T, Bp, 8 * Hp)
        cur = _bilstm_layer(gates, layer["whh_stack"], Hp=Hp, T=T,
                            last_layer=(li == n_layers - 1),
                            batch_tile=bt, t_chunk=tc)

    pooled = cur                                   # (4, Bp, Hp) f32
    out = _final_fc(pooled, params["fc_w1"], params["fc_w2"], params["fc_b"],
                    Bh=Bh, bt=bt, Hp=Hp)
    return out[:B]


# -----------------------------------------------------------------------------
# Deterministic parameter init (synthetic; mirrors module __init__ shapes)
# -----------------------------------------------------------------------------
def xavier_normal(key, shape):
    fan_out, fan_in = shape
    std = math.sqrt(2.0 / (fan_in + fan_out))
    return std * jax.random.normal(key, shape, jnp.float32)


def make_raw_params(key, vocab_size, embed_size, lstm_size, rnn_layers):
    H = lstm_size
    keys = jax.random.split(key, 2 + 8 * rnn_layers)
    raw = {
        "H": H,
        # embedding would be loaded from npz in the original; synthetic here.
        "embedding": 0.1 * jax.random.normal(keys[0], (vocab_size, embed_size),
                                             jnp.float32),
        "lstm": [],
    }
    ki = 1
    for layer in range(rnn_layers):
        d_in = embed_size if layer == 0 else 2 * H
        lp = {}
        for dname in ("fwd", "bwd"):
            w_ih = xavier_normal(keys[ki], (4 * H, d_in)); ki += 1
            w_hh = xavier_normal(keys[ki], (4 * H, H)); ki += 1
            # Module inits biases to 0.0; small nonzero values here so the
            # bias_ih + bias_hh handling is actually exercised.
            b_ih = 0.05 * jax.random.normal(keys[ki], (4 * H,), jnp.float32); ki += 1
            b_hh = 0.05 * jax.random.normal(keys[ki], (4 * H,), jnp.float32); ki += 1
            lp[dname] = (w_ih, w_hh, b_ih, b_hh)
        raw["lstm"].append(lp)
    raw["fc_w"] = xavier_normal(keys[ki], (1, 8 * H))
    raw["fc_b"] = jnp.zeros((1, 1), jnp.float32)
    return raw


def prepare_params(raw):
    """Reorganize PyTorch-layout weights into kernel-ready, lane-dense arrays."""
    H = raw["H"]
    Hp = _round_up(H, 128)          # lane-dense hidden width (padded lanes = 0)
    E = raw["embedding"].shape[1]

    def pad_gate_cols(wT):          # (rows, 4H) -> (rows, 4Hp)
        r = wT.shape[0]
        w4 = wT.reshape(r, 4, H)
        w4 = jnp.pad(w4, ((0, 0), (0, 0), (0, Hp - H)))
        return w4.reshape(r, 4 * Hp)

    def pad_rows(w, rp):
        return jnp.pad(w, ((0, rp - w.shape[0]), (0, 0)))

    def pad_bias(b):                # (4H,) -> (4Hp,)
        return jnp.pad(b.reshape(4, H), ((0, 0), (0, Hp - H))).reshape(4 * Hp)

    prepped = {"H": H, "Hp": Hp,
               "embedding_bf16": raw["embedding"].astype(jnp.bfloat16),
               "layers": []}

    for li, lp in enumerate(raw["lstm"]):
        w_ih_f, w_hh_f, b_ih_f, b_hh_f = lp["fwd"]
        w_ih_b, w_hh_b, b_ih_b, b_hh_b = lp["bwd"]
        # PyTorch adds bias_ih + bias_hh.
        b_f = pad_bias(b_ih_f + b_hh_f)
        b_b = pad_bias(b_ih_b + b_hh_b)
        layer = {"b_cat": jnp.concatenate([b_f, b_b]).reshape(1, 8 * Hp)
                 .astype(jnp.float32)}

        wih_f_T = pad_gate_cols(w_ih_f.T)        # (d_in, 4Hp)
        wih_b_T = pad_gate_cols(w_ih_b.T)
        if li == 0:
            layer["wih_cat"] = jnp.concatenate([wih_f_T, wih_b_T],
                                               axis=1).astype(jnp.bfloat16)
        else:
            # Split input rows into [prev fwd h | prev bwd h] blocks so the
            # projection reads the two bf16 sequence outputs directly.
            wf = jnp.concatenate([pad_rows(wih_f_T[:H], Hp),
                                  pad_rows(wih_b_T[:H], Hp)], axis=1)
            wb = jnp.concatenate([pad_rows(wih_f_T[H:], Hp),
                                  pad_rows(wih_b_T[H:], Hp)], axis=1)
            layer["wih_f_rows"] = wf.astype(jnp.bfloat16)      # (Hp, 8Hp)
            layer["wih_b_rows"] = wb.astype(jnp.bfloat16)

        whh_f = pad_rows(pad_gate_cols(w_hh_f.T), Hp)          # (Hp, 4Hp)
        whh_b = pad_rows(pad_gate_cols(w_hh_b.T), Hp)
        layer["whh_stack"] = jnp.stack([whh_f, whh_b], 0).astype(jnp.bfloat16)
        prepped["layers"].append(layer)

    # fc weight slices reordered to the pooled layout [max_f, mean_f, max_b, mean_b]
    fc = raw["fc_w"][0]                                        # (8H,)
    c = [fc[k * H:(k + 1) * H] for k in range(8)]
    padH = lambda v: jnp.pad(v, (0, Hp - H))
    prepped["fc_w1"] = jnp.stack([padH(c[0]), padH(c[2]), padH(c[1]),
                                  padH(c[3])], 0).reshape(4, 1, Hp)
    prepped["fc_w2"] = jnp.stack([padH(c[4]), padH(c[6]), padH(c[5]),
                                  padH(c[7])], 0).reshape(4, 1, Hp)
    prepped["fc_b"] = raw["fc_b"]
    return prepped


# -----------------------------------------------------------------------------
# Pure-JAX f32 reference (for correctness check)
# -----------------------------------------------------------------------------
def _ref_lstm_dir(x_bt, w_ih, w_hh, b_ih, b_hh, H, reverse):
    B, T, _ = x_bt.shape
    h = jnp.zeros((B, H), jnp.float32)
    c = jnp.zeros((B, H), jnp.float32)
    b = b_ih + b_hh
    order = range(T - 1, -1, -1) if reverse else range(T)
    outs = [None] * T
    for t in order:
        gates = x_bt[:, t, :] @ w_ih.T + h @ w_hh.T + b
        i = jax.nn.sigmoid(gates[:, :H])
        f = jax.nn.sigmoid(gates[:, H:2 * H])
        g = jnp.tanh(gates[:, 2 * H:3 * H])
        o = jax.nn.sigmoid(gates[:, 3 * H:])
        c = f * c + i * g
        h = o * jnp.tanh(c)
        outs[t] = h
    return jnp.stack(outs, axis=1)   # (B, T, H)


def ref_forward(raw, s1, s2):
    H = raw["H"]
    emb = raw["embedding"]

    def run(s):
        x = jnp.take(emb, s, axis=0)
        for lp in raw["lstm"]:
            fwd = _ref_lstm_dir(x, *lp["fwd"], H, reverse=False)
            bwd = _ref_lstm_dir(x, *lp["bwd"], H, reverse=True)
            x = jnp.concatenate([fwd, bwd], axis=-1)
        return x                      # (B, T, 2H)

    o1, o2 = run(s1), run(s2)
    feat = jnp.concatenate(
        [o1.max(axis=1), o1.mean(axis=1), o2.max(axis=1), o2.mean(axis=1)],
        axis=1)                       # (B, 8H)
    return feat @ raw["fc_w"].T + raw["fc_b"]


# -----------------------------------------------------------------------------
if __name__ == "__main__":
    # small config consistent with the module: hidden_size == lstm_size
    VOCAB, EMBED, LSTM_SIZE, LAYERS = 100, 32, 32, 2
    B, T = 2, 8

    key = jax.random.PRNGKey(0)
    k_par, k_s1, k_s2 = jax.random.split(key, 3)
    raw = make_raw_params(k_par, VOCAB, EMBED, LSTM_SIZE, LAYERS)
    params = prepare_params(raw)

    s1 = jax.random.randint(k_s1, (B, T), 0, VOCAB, dtype=jnp.int32)
    s2 = jax.random.randint(k_s2, (B, T), 0, VOCAB, dtype=jnp.int32)

    out = jax.block_until_ready(bilstm_forward(params, s1, s2))
    ref = jax.block_until_ready(ref_forward(raw, s1, s2))

    assert out.shape == (B, 1), out.shape
    # bf16 MXU operands / bf16 gate storage vs. f32 reference -> loose tol
    assert jnp.allclose(out, ref, rtol=5e-2, atol=1e-2), (out, ref)
    print("KERNEL_OK")
</pallas_src>

<mosaic_0001>
module attributes {stable_mosaic.version = 11 : i64} {
  func.func @_proj_kernel(%arg0: i32, %arg1: memref<128x32xbf16, #tpu.memory_space<vmem>>, %arg2: memref<32x1024xbf16, #tpu.memory_space<vmem>>, %arg3: memref<1x1024xf32, #tpu.memory_space<vmem>>, %arg4: memref<128x1024xbf16, #tpu.memory_space<vmem>>) attributes {dimension_semantics = [#tpu.dimension_semantics<parallel>], iteration_bounds = array<i64: 1>, scalar_prefetch = 0 : i64, scratch_operands = 0 : i64, tpu.core_type = #tpu.core_type<tc>, window_params = [{transform_indices = @transform_0, window_bounds = array<i64: 128, 32>}, {pipeline_mode = #tpu.pipeline_mode<synchronous>, transform_indices = @transform_1, window_bounds = array<i64: 32, 1024>}, {pipeline_mode = #tpu.pipeline_mode<synchronous>, transform_indices = @transform_2, window_bounds = array<i64: 1, 1024>}, {transform_indices = @transform_3, window_bounds = array<i64: 128, 1024>}]} {
    %c0 = arith.constant 0 : index
    %c0_0 = arith.constant 0 : index
    %0 = vector.load %arg1[%c0, %c0_0] : memref<128x32xbf16, #tpu.memory_space<vmem>>, vector<128x32xbf16>
    %c0_1 = arith.constant 0 : index
    %c0_2 = arith.constant 0 : index
    %1 = vector.load %arg2[%c0_1, %c0_2] : memref<32x1024xbf16, #tpu.memory_space<vmem>>, vector<32x1024xbf16>
    %cst = arith.constant dense<0.000000e+00> : vector<128x1024xf32>
    %2 = tpu.matmul %0, %1, %cst {dimension_numbers = #tpu.dot_dimension_numbers<[1], [0], [0], [1], [0, 0, 1, 1], [], []>} : vector<128x32xbf16>, vector<32x1024xbf16>, vector<128x1024xf32> -> vector<128x1024xf32>
    %c0_3 = arith.constant 0 : index
    %c0_4 = arith.constant 0 : index
    %3 = vector.load %arg3[%c0_3, %c0_4] : memref<1x1024xf32, #tpu.memory_space<vmem>>, vector<1x1024xf32>
    %4 = vector.broadcast %3 : vector<1x1024xf32> to vector<128x1024xf32>
    %5 = arith.addf %2, %4 : vector<128x1024xf32>
    %6 = arith.truncf %5 : vector<128x1024xf32> to vector<128x1024xbf16>
    %c0_5 = arith.constant 0 : index
    %c0_6 = arith.constant 0 : index
    %7 = vector.load %arg4[%c0_5, %c0_6] : memref<128x1024xbf16, #tpu.memory_space<vmem>>, vector<128x1024xbf16>
    tpu.vector_store %arg4[%c0_5, %c0_6], %6 {strides = array<i32>} : memref<128x1024xbf16, #tpu.memory_space<vmem>>, vector<128x1024xbf16>,
    return
  }
  func.func @transform_0(%arg0: i32) -> (i32, i32) {
    %c0_i32 = arith.constant 0 : i32
    %c0_i32_0 = arith.constant 0 : i32
    return %arg0, %c0_i32 : i32, i32
  }
  func.func @transform_1(%arg0: i32) -> (i32, i32) {
    %c0_i32 = arith.constant 0 : i32
    %c0_i32_0 = arith.constant 0 : i32
    %c0_i32_1 = arith.constant 0 : i32
    return %c0_i32, %c0_i32_0 : i32, i32
  }
  func.func @transform_2(%arg0: i32) -> (i32, i32) {
    %c0_i32 = arith.constant 0 : i32
    %c0_i32_0 = arith.constant 0 : i32
    %c0_i32_1 = arith.constant 0 : i32
    return %c0_i32, %c0_i32_0 : i32, i32
  }
  func.func @transform_3(%arg0: i32) -> (i32, i32) {
    %c0_i32 = arith.constant 0 : i32
    %c0_i32_0 = arith.constant 0 : i32
    return %arg0, %c0_i32 : i32, i32
  }
}

</mosaic_0001>

<llo_original>
// kernel: tpu_custom_call.1
$region0: #{tpu_custom_call.1}
  #allocation0 [shape = 'u32[]', space=smem, size = 0x4, offset = 0x4, fixed_abs, tag = 'smem constant byte address 0x4 - core index']
  #allocation1 [shape = 'u32[72,128]{1,0:T(1,128)}', space=vmem, size = 0x9000, scoped, tag = 'internal scratch']
  %s0 = inlined_call_operand.vmem [shape: bf16[128,32], index: 0, kind: input, shape index: {}]
  %s1 = inlined_call_operand.hbm [shape: bf16[32,1024], index: 1, kind: input, shape index: {}]
  %s2 = inlined_call_operand.vmem [shape: f32[1,1024], index: 2, kind: input, shape index: {}]
  %s3 = inlined_call_operand.hbm [shape: bf16[128,1024], index: 3, kind: output, shape index: {}]
  %s4 = sld [smem:[#allocation0]]
  $region26: #{tpu_custom_call.1} parent=0
    _
  %s6 = ssub.s32 1, %s4
  %s7 = scalar_select 0, %s6, %s4
  $region1: #{tpu_custom_call.1} parent=0
    #allocation2 [shape = 'u8[65536]{0}', space=vmem, size = 0x10000, scoped, tag = 'input window, operand 1, single buffered']
    #allocation3 [shape = 's32[1]{0}', space=sflag, size = 0x4, scoped, tag = 'scoped memory for tpu_custom_call.1']
    #allocation4 [shape = 's32[1]{0}', space=sflag, size = 0x4, scoped, tag = 'scoped memory for tpu_custom_call.1']
    #allocation5 [shape = 'u8[262144]{0}', space=vmem, size = 0x40000, scoped, tag = 'output window, operand 0, single buffered']
    %8 = vsyncpa [#allocation3], 0
    %9 = vsyncpa [#allocation4], 0
    // Predicated region
    $region2: #{tpu_custom_call.1} parent=1 // pred_check
      _
    $region3: #{tpu_custom_call.1} parent=1 // pred_check_branch
      %11 = sbr.rel (0) target = $region5
    $region4: #{tpu_custom_call.1} parent=1 // pred_region
      _
    $region5: #{tpu_custom_call.1} parent=1 // pred_fallthru
      _
    // Predicated region
    $region6: #{tpu_custom_call.1} parent=1 // pred_check
      _
    $region7: #{tpu_custom_call.1} parent=1 // pred_check_branch
      %13 = sbr.rel (0) target = $region9
    $region8: #{tpu_custom_call.1} parent=1 // pred_region
      %15 = vsyncadd [#allocation3], 0
      %s16 = sshll.u32 %s1, 4
      %s17 = int_to_ptr.hbm [resolvable:$true] %s16
      %s18 = sshll.u32 [#allocation2], 4
      %s19 = int_to_ptr.vmem [resolvable:$true] %s18
      %24 = dma.hbm_to_vmem [thread:$0]  %s17, 2048, %s19, [#allocation3], 512, 512, 32
    $region9: #{tpu_custom_call.1} parent=1 // pred_fallthru
      _
    // Predicated region
    $region10: #{tpu_custom_call.1} parent=1 // pred_check
      _
    $region11: #{tpu_custom_call.1} parent=1 // pred_check_branch
      %26 = sbr.rel (0) target = $region13
    $region12: #{tpu_custom_call.1} parent=1 // pred_region
      _
    $region13: #{tpu_custom_call.1} parent=1 // pred_fallthru
      _
    // Predicated region
    $region14: #{tpu_custom_call.1} parent=1 // pred_check
      _
    $region15: #{tpu_custom_call.1} parent=1 // pred_check_branch
      %28 = sbr.rel (0) target = $region17
    $region16: #{tpu_custom_call.1} parent=1 // pred_region
      %30 = dma.done [#allocation3], 2048
    $region17: #{tpu_custom_call.1} parent=1 // pred_fallthru
      _
    %v32 = vld [vmem:[%s0] sm:$0xf]
    %v33 = vld [vmem:[%s0 + $0x4] sm:$0xf]
    %v34 = vld [vmem:[%s0 + $0x8] sm:$0xf]
    %v35 = vld [vmem:[%s0 + $0xc] sm:$0xf]
    %v36 = vld [vmem:[%s0 + $0x10] sm:$0xf]
    %v37 = vld [vmem:[%s0 + $0x14] sm:$0xf]
    %v38 = vld [vmem:[%s0 + $0x18] sm:$0xf]
    %v39 = vld [vmem:[%s0 + $0x1c] sm:$0xf]
    %v40 = vld [vmem:[%s0 + $0x20] sm:$0xf]
    %v41 = vld [vmem:[%s0 + $0x24] sm:$0xf]
    %v42 = vld [vmem:[%s0 + $0x28] sm:$0xf]
    %v43 = vld [vmem:[%s0 + $0x2c] sm:$0xf]
    %v44 = vld [vmem:[%s0 + $0x30] sm:$0xf]
    %v45 = vld [vmem:[%s0 + $0x34] sm:$0xf]
    %v46 = vld [vmem:[%s0 + $0x38] sm:$0xf]
    %v47 = vld [vmem:[%s0 + $0x3c] sm:$0xf]
    %v48 = vld [vmem:[#allocation2] sm:$0xff]
    %v49 = vld [vmem:[#allocation2 + $0x8] sm:$0xff]
    %v50 = vld [vmem:[#allocation2 + $0x10] sm:$0xff]
    %v51 = vld [vmem:[#allocation2 + $0x18] sm:$0xff]
    %v52 = vld [vmem:[#allocation2 + $0x20] sm:$0xff]
    %v53 = vld [vmem:[#allocation2 + $0x28] sm:$0xff]
    %v54 = vld [vmem:[#allocation2 + $0x30] sm:$0xff]
    %v55 = vld [vmem:[#allocation2 + $0x38] sm:$0xff]
    %v56 = vld [vmem:[#allocation2 + $0x40] sm:$0xff]
    %v57 = vld [vmem:[#allocation2 + $0x48] sm:$0xff]
    %v58 = vld [vmem:[#allocation2 + $0x50] sm:$0xff]
    %v59 = vld [vmem:[#allocation2 + $0x58] sm:$0xff]
    %v60 = vld [vmem:[#allocation2 + $0x60] sm:$0xff]
    %v61 = vld [vmem:[#allocation2 + $0x68] sm:$0xff]
    %v62 = vld [vmem:[#allocation2 + $0x70] sm:$0xff]
    %v63 = vld [vmem:[#allocation2 + $0x78] sm:$0xff]
    %v64 = vld [vmem:[%s2] sm:$0xff]
    %v66 = vperm.slane %v64, 0
    %v67 = vperm.slane %v64, 1
    %v68 = vperm.slane %v64, 2
    %v69 = vperm.slane %v64, 3
    %v70 = vperm.slane %v64, 4
    %v71 = vperm.slane %v64, 5
    %v72 = vperm.slane %v64, 6
    %v73 = vperm.slane %v64, 7
    %v98 = vunpack.c.l.b16 %v32
    %v99 = vunpack.c.l.b16 %v33
    %v100 = vunpack.c.l.b16 %v34
    %v101 = vunpack.c.l.b16 %v35
    %v102 = vunpack.c.l.b16 %v36
    %v103 = vunpack.c.l.b16 %v37
    %v104 = vunpack.c.l.b16 %v38
    %v105 = vunpack.c.l.b16 %v39
    %v106 = vunpack.c.l.b16 %v40
    %v107 = vunpack.c.l.b16 %v41
    %v108 = vunpack.c.l.b16 %v42
    %v109 = vunpack.c.l.b16 %v43
    %v110 = vunpack.c.l.b16 %v44
    %v111 = vunpack.c.l.b16 %v45
    %v112 = vunpack.c.l.b16 %v46
    %v113 = vunpack.c.l.b16 %v47
    %v114 = vpack.c.b16 %v99, %v98
    %v115 = vpack.c.b16 %v101, %v100
    %v116 = vpack.c.b16 %v103, %v102
    %v117 = vpack.c.b16 %v105, %v104
    %v118 = vpack.c.b16 %v107, %v106
    %v119 = vpack.c.b16 %v109, %v108
    %v120 = vpack.c.b16 %v111, %v110
    %v121 = vpack.c.b16 %v113, %v112
    %v138 = vunpack.c.l.b16 %v48
    %v139 = vunpack.c.h.b16 %v48
    %v140 = vunpack.c.l.b16 %v49
    %v141 = vunpack.c.h.b16 %v49
    %v142 = vunpack.c.l.b16 %v50
    %v143 = vunpack.c.h.b16 %v50
    %v144 = vunpack.c.l.b16 %v51
    %v145 = vunpack.c.h.b16 %v51
    %v146 = vunpack.c.l.b16 %v52
    %v147 = vunpack.c.h.b16 %v52
    %v148 = vunpack.c.l.b16 %v53
    %v149 = vunpack.c.h.b16 %v53
    %v150 = vunpack.c.l.b16 %v54
    %v151 = vunpack.c.h.b16 %v54
    %v152 = vunpack.c.l.b16 %v55
    %v153 = vunpack.c.h.b16 %v55
    %v154 = vunpack.c.l.b16 %v56
    %v155 = vunpack.c.h.b16 %v56
    %v156 = vunpack.c.l.b16 %v57
    %v157 = vunpack.c.h.b16 %v57
    %v158 = vunpack.c.l.b16 %v58
    %v159 = vunpack.c.h.b16 %v58
    %v160 = vunpack.c.l.b16 %v59
    %v161 = vunpack.c.h.b16 %v59
    %v162 = vunpack.c.l.b16 %v60
    %v163 = vunpack.c.h.b16 %v60
    %v164 = vunpack.c.l.b16 %v61
    %v165 = vunpack.c.h.b16 %v61
    %v166 = vunpack.c.l.b16 %v62
    %v167 = vunpack.c.h.b16 %v62
    %v168 = vunpack.c.l.b16 %v63
    %v169 = vunpack.c.h.b16 %v63
    %v170 = vpack.c.b16 %v146, %v138
    %v171 = vpack.c.b16 %v147, %v139
    %v172 = vpack.c.b16 %v148, %v140
    %v173 = vpack.c.b16 %v149, %v141
    %v174 = vpack.c.b16 %v150, %v142
    %v175 = vpack.c.b16 %v151, %v143
    %v176 = vpack.c.b16 %v152, %v144
    %v177 = vpack.c.b16 %v153, %v145
    %v178 = vpack.c.b16 %v162, %v154
    %v179 = vpack.c.b16 %v163, %v155
    %v180 = vpack.c.b16 %v164, %v156
    %v181 = vpack.c.b16 %v165, %v157
    %v182 = vpack.c.b16 %v166, %v158
    %v183 = vpack.c.b16 %v167, %v159
    %v184 = vpack.c.b16 %v168, %v160
    %v185 = vpack.c.b16 %v169, %v161
    %vm202 = vcmask 261120
    %v204 = vsel %vm202, %v114, 0
    %v207 = vsel %vm202, %v115, 0
    %v210 = vsel %vm202, %v116, 0
    %v213 = vsel %vm202, %v117, 0
    %v216 = vsel %vm202, %v118, 0
    %v219 = vsel %vm202, %v119, 0
    %v222 = vsel %vm202, %v120, 0
    %v225 = vsel %vm202, %v121, 0
    %227 = vmatpush.bf16.msra.mxu0 0
    %228 = vmatpush.bf16.msra.mxu0 0
    %229 = vmatpush.bf16.msra.mxu0 0
    %230 = vmatpush.bf16.msra.mxu0 0
    %231 = vmatpush.bf16.msra.mxu0 0
    %232 = vmatpush.bf16.msra.mxu0 0
    %233 = vmatpush.bf16.msra.mxu0 %v178
    %234 = vmatpush.bf16.msra.mxu0 %v170
    %235 = vmatmul.bf16.gmra.mxu0 %v204
    %v236 = vpop.f32.mrf.mxu0
    %v237 = vadd.f32 %v66, %v236
    %v238 = vpop.f32.mrf.mxu0
    %v239 = vadd.f32 %v66, %v238
    %240 = vmatmul.bf16.gmra.mxu0 %v207
    %v241 = vpop.f32.mrf.mxu0
    %v242 = vadd.f32 %v66, %v241
    %v243 = vpop.f32.mrf.mxu0
    %v244 = vadd.f32 %v66, %v243
    %245 = vmatmul.bf16.gmra.mxu0 %v210
    %v246 = vpop.f32.mrf.mxu0
    %v247 = vadd.f32 %v66, %v246
    %v248 = vpop.f32.mrf.mxu0
    %v249 = vadd.f32 %v66, %v248
    %250 = vmatmul.bf16.gmra.mxu0 %v213
    %v251 = vpop.f32.mrf.mxu0
    %v252 = vadd.f32 %v66, %v251
    %v253 = vpop.f32.mrf.mxu0
    %v254 = vadd.f32 %v66, %v253
    %255 = vmatmul.bf16.gmra.mxu0 %v216
    %v256 = vpop.f32.mrf.mxu0
    %v257 = vadd.f32 %v66, %v256
    %v258 = vpop.f32.mrf.mxu0
    %v259 = vadd.f32 %v66, %v258
    %260 = vmatmul.bf16.gmra.mxu0 %v219
    %v261 = vpop.f32.mrf.mxu0
    %v262 = vadd.f32 %v66, %v261
    %v263 = vpop.f32.mrf.mxu0
    %v264 = vadd.f32 %v66, %v263
    %265 = vmatmul.bf16.gmra.mxu0 %v222
    %v266 = vpop.f32.mrf.mxu0
    %v267 = vadd.f32 %v66, %v266
    %v268 = vpop.f32.mrf.mxu0
    %v269 = vadd.f32 %v66, %v268
    %270 = vmatmul.bf16.gmra.mxu0 %v225
    %v271 = vpop.f32.mrf.mxu0
    %v272 = vadd.f32 %v66, %v271
    %v273 = vpop.f32.mrf.mxu0
    %v274 = vadd.f32 %v66, %v273
    %275 = vdwg.mxu0
    %276 = vmatpush.bf16.msra.mxu0 0
    %277 = vmatpush.bf16.msra.mxu0 0
    %278 = vmatpush.bf16.msra.mxu0 0
    %279 = vmatpush.bf16.msra.mxu0 0
    %280 = vmatpush.bf16.msra.mxu0 0
    %281 = vmatpush.bf16.msra.mxu0 0
    %282 = vmatpush.bf16.msra.mxu0 %v179
    %283 = vmatpush.bf16.msra.mxu0 %v171
    %284 = vmatmul.bf16.gmra.mxu0 %v204
    %v285 = vpop.f32.mrf.mxu0
    %v286 = vadd.f32 %v67, %v285
    %v287 = vpop.f32.mrf.mxu0
    %v288 = vadd.f32 %v67, %v287
    %289 = vmatmul.bf16.gmra.mxu0 %v207
    %v290 = vpop.f32.mrf.mxu0
    %v291 = vadd.f32 %v67, %v290
    %v292 = vpop.f32.mrf.mxu0
    %v293 = vadd.f32 %v67, %v292
    %294 = vmatmul.bf16.gmra.mxu0 %v210
    %v295 = vpop.f32.mrf.mxu0
    %v296 = vadd.f32 %v67, %v295
    %v297 = vpop.f32.mrf.mxu0
    %v298 = vadd.f32 %v67, %v297
    %299 = vmatmul.bf16.gmra.mxu0 %v213
    %v300 = vpop.f32.mrf.mxu0
    %v301 = vadd.f32 %v67, %v300
    %v302 = vpop.f32.mrf.mxu0
    %v303 = vadd.f32 %v67, %v302
    %304 = vmatmul.bf16.gmra.mxu0 %v216
    %v305 = vpop.f32.mrf.mxu0
    %v306 = vadd.f32 %v67, %v305
    %v307 = vpop.f32.mrf.mxu0
    %v308 = vadd.f32 %v67, %v307
    %309 = vmatmul.bf16.gmra.mxu0 %v219
    %v310 = vpop.f32.mrf.mxu0
    %v311 = vadd.f32 %v67, %v310
    %v312 = vpop.f32.mrf.mxu0
    %v313 = vadd.f32 %v67, %v312
    %314 = vmatmul.bf16.gmra.mxu0 %v222
    %v315 = vpop.f32.mrf.mxu0
    %v316 = vadd.f32 %v67, %v315
    %v317 = vpop.f32.mrf.mxu0
    %v318 = vadd.f32 %v67, %v317
    %319 = vmatmul.bf16.gmra.mxu0 %v225
    %v320 = vpop.f32.mrf.mxu0
    %v321 = vadd.f32 %v67, %v320
    %v322 = vpop.f32.mrf.mxu0
    %v323 = vadd.f32 %v67, %v322
    %324 = vdwg.mxu0
    %325 = vmatpush.bf16.msra.mxu0 0
    %326 = vmatpush.bf16.msra.mxu0 0
    %327 = vmatpush.bf16.msra.mxu0 0
    %328 = vmatpush.bf16.msra.mxu0 0
    %329 = vmatpush.bf16.msra.mxu0 0
    %330 = vmatpush.bf16.msra.mxu0 0
    %331 = vmatpush.bf16.msra.mxu0 %v180
    %332 = vmatpush.bf16.msra.mxu0 %v172
    %333 = vmatmul.bf16.gmra.mxu0 %v204
    %v334 = vpop.f32.mrf.mxu0
    %v335 = vadd.f32 %v68, %v334
    %v336 = vpop.f32.mrf.mxu0
    %v337 = vadd.f32 %v68, %v336
    %338 = vmatmul.bf16.gmra.mxu0 %v207
    %v339 = vpop.f32.mrf.mxu0
    %v340 = vadd.f32 %v68, %v339
    %v341 = vpop.f32.mrf.mxu0
    %v342 = vadd.f32 %v68, %v341
    %343 = vmatmul.bf16.gmra.mxu0 %v210
    %v344 = vpop.f32.mrf.mxu0
    %v345 = vadd.f32 %v68, %v344
    %v346 = vpop.f32.mrf.mxu0
    %v347 = vadd.f32 %v68, %v346
    %348 = vmatmul.bf16.gmra.mxu0 %v213
    %v349 = vpop.f32.mrf.mxu0
    %v350 = vadd.f32 %v68, %v349
    %v351 = vpop.f32.mrf.mxu0
    %v352 = vadd.f32 %v68, %v351
    %353 = vmatmul.bf16.gmra.mxu0 %v216
    %v354 = vpop.f32.mrf.mxu0
    %v355 = vadd.f32 %v68, %v354
    %v356 = vpop.f32.mrf.mxu0
    %v357 = vadd.f32 %v68, %v356
    %358 = vmatmul.bf16.gmra.mxu0 %v219
    %v359 = vpop.f32.mrf.mxu0
    %v360 = vadd.f32 %v68, %v359
    %v361 = vpop.f32.mrf.mxu0
    %v362 = vadd.f32 %v68, %v361
    %363 = vmatmul.bf16.gmra.mxu0 %v222
    %v364 = vpop.f32.mrf.mxu0
    %v365 = vadd.f32 %v68, %v364
    %v366 = vpop.f32.mrf.mxu0
    %v367 = vadd.f32 %v68, %v366
    %368 = vmatmul.bf16.gmra.mxu0 %v225
    %v369 = vpop.f32.mrf.mxu0
    %v370 = vadd.f32 %v68, %v369
    %v371 = vpop.f32.mrf.mxu0
    %v372 = vadd.f32 %v68, %v371
    %373 = vdwg.mxu0
    %374 = vmatpush.bf16.msra.mxu0 0
    %375 = vmatpush.bf16.msra.mxu0 0
    %376 = vmatpush.bf16.msra.mxu0 0
    %377 = vmatpush.bf16.msra.mxu0 0
    %378 = vmatpush.bf16.msra.mxu0 0
    %379 = vmatpush.bf16.msra.mxu0 0
    %380 = vmatpush.bf16.msra.mxu0 %v181
    %381 = vmatpush.bf16.msra.mxu0 %v173
    %382 = vmatmul.bf16.gmra.mxu0 %v204
    %v383 = vpop.f32.mrf.mxu0
    %v384 = vadd.f32 %v69, %v383
    %v385 = vpop.f32.mrf.mxu0
    %v386 = vadd.f32 %v69, %v385
    %387 = vmatmul.bf16.gmra.mxu0 %v207
    %v388 = vpop.f32.mrf.mxu0
    %v389 = vadd.f32 %v69, %v388
    %v390 = vpop.f32.mrf.mxu0
    %v391 = vadd.f32 %v69, %v390
    %392 = vmatmul.bf16.gmra.mxu0 %v210
    %v393 = vpop.f32.mrf.mxu0
    %v394 = vadd.f32 %v69, %v393
    %v395 = vpop.f32.mrf.mxu0
    %v396 = vadd.f32 %v69, %v395
    %397 = vmatmul.bf16.gmra.mxu0 %v213
    %v398 = vpop.f32.mrf.mxu0
    %v399 = vadd.f32 %v69, %v398
    %v400 = vpop.f32.mrf.mxu0
    %v401 = vadd.f32 %v69, %v400
    %402 = vmatmul.bf16.gmra.mxu0 %v216
    %v403 = vpop.f32.mrf.mxu0
    %v404 = vadd.f32 %v69, %v403
    %v405 = vpop.f32.mrf.mxu0
    %v406 = vadd.f32 %v69, %v405
    %407 = vmatmul.bf16.gmra.mxu0 %v219
    %v408 = vpop.f32.mrf.mxu0
    %v409 = vadd.f32 %v69, %v408
    %v410 = vpop.f32.mrf.mxu0
    %v411 = vadd.f32 %v69, %v410
    %412 = vmatmul.bf16.gmra.mxu0 %v222
    %v413 = vpop.f32.mrf.mxu0
    %v414 = vadd.f32 %v69, %v413
    %v415 = vpop.f32.mrf.mxu0
    %v416 = vadd.f32 %v69, %v415
    %417 = vmatmul.bf16.gmra.mxu0 %v225
    %v418 = vpop.f32.mrf.mxu0
    %v419 = vadd.f32 %v69, %v418
    %v420 = vpop.f32.mrf.mxu0
    %v421 = vadd.f32 %v69, %v420
    %422 = vdwg.mxu0
    %423 = vmatpush.bf16.msra.mxu0 0
    %424 = vmatpush.bf16.msra.mxu0 0
    %425 = vmatpush.bf16.msra.mxu0 0
    %426 = vmatpush.bf16.msra.mxu0 0
    %427 = vmatpush.bf16.msra.mxu0 0
    %428 = vmatpush.bf16.msra.mxu0 0
    %429 = vmatpush.bf16.msra.mxu0 %v182
    %430 = vmatpush.bf16.msra.mxu0 %v174
    %431 = vmatmul.bf16.gmra.mxu0 %v204
    %v432 = vpop.f32.mrf.mxu0
    %v433 = vadd.f32 %v70, %v432
    %v434 = vpop.f32.mrf.mxu0
    %v435 = vadd.f32 %v70, %v434
    %436 = vmatmul.bf16.gmra.mxu0 %v207
    %v437 = vpop.f32.mrf.mxu0
    %v438 = vadd.f32 %v70, %v437
    %v439 = vpop.f32.mrf.mxu0
    %v440 = vadd.f32 %v70, %v439
    %441 = vmatmul.bf16.gmra.mxu0 %v210
    %v442 = vpop.f32.mrf.mxu0
    %v443 = vadd.f32 %v70, %v442
    %v444 = vpop.f32.mrf.mxu0
    %v445 = vadd.f32 %v70, %v444
    %446 = vmatmul.bf16.gmra.mxu0 %v213
    %v447 = vpop.f32.mrf.mxu0
    %v448 = vadd.f32 %v70, %v447
    %v449 = vpop.f32.mrf.mxu0
    %v450 = vadd.f32 %v70, %v449
    %451 = vmatmul.bf16.gmra.mxu0 %v216
    %v452 = vpop.f32.mrf.mxu0
    %v453 = vadd.f32 %v70, %v452
    %v454 = vpop.f32.mrf.mxu0
    %v455 = vadd.f32 %v70, %v454
    %456 = vmatmul.bf16.gmra.mxu0 %v219
    %v457 = vpop.f32.mrf.mxu0
    %v458 = vadd.f32 %v70, %v457
    %v459 = vpop.f32.mrf.mxu0
    %v460 = vadd.f32 %v70, %v459
    %461 = vmatmul.bf16.gmra.mxu0 %v222
    %v462 = vpop.f32.mrf.mxu0
    %v463 = vadd.f32 %v70, %v462
    %v464 = vpop.f32.mrf.mxu0
    %v465 = vadd.f32 %v70, %v464
    %466 = vmatmul.bf16.gmra.mxu0 %v225
    %v467 = vpop.f32.mrf.mxu0
    %v468 = vadd.f32 %v70, %v467
    %v469 = vpop.f32.mrf.mxu0
    %v470 = vadd.f32 %v70, %v469
    %471 = vdwg.mxu0
    %472 = vmatpush.bf16.msra.mxu0 0
    %473 = vmatpush.bf16.msra.mxu0 0
    %474 = vmatpush.bf16.msra.mxu0 0
    %475 = vmatpush.bf16.msra.mxu0 0
    %476 = vmatpush.bf16.msra.mxu0 0
    %477 = vmatpush.bf16.msra.mxu0 0
    %478 = vmatpush.bf16.msra.mxu0 %v183
    %479 = vmatpush.bf16.msra.mxu0 %v175
    %480 = vmatmul.bf16.gmra.mxu0 %v204
    %v481 = vpop.f32.mrf.mxu0
    %v482 = vadd.f32 %v71, %v481
    %v483 = vpop.f32.mrf.mxu0
    %v484 = vadd.f32 %v71, %v483
    %485 = vmatmul.bf16.gmra.mxu0 %v207
    %v486 = vpop.f32.mrf.mxu0
    %v487 = vadd.f32 %v71, %v486
    %v488 = vpop.f32.mrf.mxu0
    %v489 = vadd.f32 %v71, %v488
    %490 = vmatmul.bf16.gmra.mxu0 %v210
    %v491 = vpop.f32.mrf.mxu0
    %v492 = vadd.f32 %v71, %v491
    %v493 = vpop.f32.mrf.mxu0
    %v494 = vadd.f32 %v71, %v493
    %495 = vmatmul.bf16.gmra.mxu0 %v213
    %v496 = vpop.f32.mrf.mxu0
    %v497 = vadd.f32 %v71, %v496
    %v498 = vpop.f32.mrf.mxu0
    %v499 = vadd.f32 %v71, %v498
    %500 = vmatmul.bf16.gmra.mxu0 %v216
    %v501 = vpop.f32.mrf.mxu0
    %v502 = vadd.f32 %v71, %v501
    %v503 = vpop.f32.mrf.mxu0
    %v504 = vadd.f32 %v71, %v503
    %505 = vmatmul.bf16.gmra.mxu0 %v219
    %v506 = vpop.f32.mrf.mxu0
    %v507 = vadd.f32 %v71, %v506
    %v508 = vpop.f32.mrf.mxu0
    %v509 = vadd.f32 %v71, %v508
    %510 = vmatmul.bf16.gmra.mxu0 %v222
    %v511 = vpop.f32.mrf.mxu0
    %v512 = vadd.f32 %v71, %v511
    %v513 = vpop.f32.mrf.mxu0
    %v514 = vadd.f32 %v71, %v513
    %515 = vmatmul.bf16.gmra.mxu0 %v225
    %v516 = vpop.f32.mrf.mxu0
    %v517 = vadd.f32 %v71, %v516
    %v518 = vpop.f32.mrf.mxu0
    %v519 = vadd.f32 %v71, %v518
    %520 = vdwg.mxu0
    %521 = vmatpush.bf16.msra.mxu0 0
    %522 = vmatpush.bf16.msra.mxu0 0
    %523 = vmatpush.bf16.msra.mxu0 0
    %524 = vmatpush.bf16.msra.mxu0 0
    %525 = vmatpush.bf16.msra.mxu0 0
    %526 = vmatpush.bf16.msra.mxu0 0
    %527 = vmatpush.bf16.msra.mxu0 %v184
    %528 = vmatpush.bf16.msra.mxu0 %v176
    %529 = vmatmul.bf16.gmra.mxu0 %v204
    %v530 = vpop.f32.mrf.mxu0
    %v531 = vadd.f32 %v72, %v530
    %v532 = vpop.f32.mrf.mxu0
    %v533 = vadd.f32 %v72, %v532
    %534 = vmatmul.bf16.gmra.mxu0 %v207
    %v535 = vpop.f32.mrf.mxu0
    %v536 = vadd.f32 %v72, %v535
    %v537 = vpop.f32.mrf.mxu0
    %v538 = vadd.f32 %v72, %v537
    %539 = vmatmul.bf16.gmra.mxu0 %v210
    %v540 = vpop.f32.mrf.mxu0
    %v541 = vadd.f32 %v72, %v540
    %v542 = vpop.f32.mrf.mxu0
    %v543 = vadd.f32 %v72, %v542
    %544 = vmatmul.bf16.gmra.mxu0 %v213
    %v545 = vpop.f32.mrf.mxu0
    %v546 = vadd.f32 %v72, %v545
    %v547 = vpop.f32.mrf.mxu0
    %v548 = vadd.f32 %v72, %v547
    %549 = vmatmul.bf16.gmra.mxu0 %v216
    %v550 = vpop.f32.mrf.mxu0
    %v551 = vadd.f32 %v72, %v550
    %v552 = vpop.f32.mrf.mxu0
    %v553 = vadd.f32 %v72, %v552
    %554 = vmatmul.bf16.gmra.mxu0 %v219
    %v555 = vpop.f32.mrf.mxu0
    %v556 = vadd.f32 %v72, %v555
    %v557 = vpop.f32.mrf.mxu0
    %v558 = vadd.f32 %v72, %v557
    %559 = vmatmul.bf16.gmra.mxu0 %v222
    %v560 = vpop.f32.mrf.mxu0
    %v561 = vadd.f32 %v72, %v560
    %v562 = vpop.f32.mrf.mxu0
    %v563 = vadd.f32 %v72, %v562
    %564 = vmatmul.bf16.gmra.mxu0 %v225
    %v565 = vpop.f32.mrf.mxu0
    %v566 = vadd.f32 %v72, %v565
    %v567 = vpop.f32.mrf.mxu0
    %v568 = vadd.f32 %v72, %v567
    %569 = vdwg.mxu0
    %570 = vmatpush.bf16.msra.mxu0 0
    %571 = vmatpush.bf16.msra.mxu0 0
    %572 = vmatpush.bf16.msra.mxu0 0
    %573 = vmatpush.bf16.msra.mxu0 0
    %574 = vmatpush.bf16.msra.mxu0 0
    %575 = vmatpush.bf16.msra.mxu0 0
    %576 = vmatpush.bf16.msra.mxu0 %v185
    %577 = vmatpush.bf16.msra.mxu0 %v177
    %578 = vmatmul.bf16.gmra.mxu0 %v204
    %v579 = vpop.f32.mrf.mxu0
    %v580 = vadd.f32 %v73, %v579
    %v581 = vpop.f32.mrf.mxu0
    %v582 = vadd.f32 %v73, %v581
    %583 = vmatmul.bf16.gmra.mxu0 %v207
    %v584 = vpop.f32.mrf.mxu0
    %v585 = vadd.f32 %v73, %v584
    %v586 = vpop.f32.mrf.mxu0
    %v587 = vadd.f32 %v73, %v586
    %588 = vmatmul.bf16.gmra.mxu0 %v210
    %v589 = vpop.f32.mrf.mxu0
    %v590 = vadd.f32 %v73, %v589
    %v591 = vpop.f32.mrf.mxu0
    %v592 = vadd.f32 %v73, %v591
    %593 = vmatmul.bf16.gmra.mxu0 %v213
    %v594 = vpop.f32.mrf.mxu0
    %v595 = vadd.f32 %v73, %v594
    %v596 = vpop.f32.mrf.mxu0
    %v597 = vadd.f32 %v73, %v596
    %598 = vmatmul.bf16.gmra.mxu0 %v216
    %v599 = vpop.f32.mrf.mxu0
    %v600 = vadd.f32 %v73, %v599
    %v601 = vpop.f32.mrf.mxu0
    %v602 = vadd.f32 %v73, %v601
    %603 = vmatmul.bf16.gmra.mxu0 %v219
    %v604 = vpop.f32.mrf.mxu0
    %v605 = vadd.f32 %v73, %v604
    %v606 = vpop.f32.mrf.mxu0
    %v607 = vadd.f32 %v73, %v606
    %608 = vmatmul.bf16.gmra.mxu0 %v222
    %v609 = vpop.f32.mrf.mxu0
    %v610 = vadd.f32 %v73, %v609
    %v611 = vpop.f32.mrf.mxu0
    %v612 = vadd.f32 %v73, %v611
    %613 = vmatmul.bf16.gmra.mxu0 %v225
    %v614 = vpop.f32.mrf.mxu0
    %v615 = vadd.f32 %v73, %v614
    %v616 = vpop.f32.mrf.mxu0
    %v617 = vadd.f32 %v73, %v616
    %618 = vdwg.mxu0
    %v619 = vpack.c.bf16 %v286, %v237
    %v620 = vpack.c.bf16 %v384, %v335
    %v621 = vpack.c.bf16 %v482, %v433
    %v622 = vpack.c.bf16 %v580, %v531
    %v623 = vpack.c.bf16 %v288, %v239
    %v624 = vpack.c.bf16 %v386, %v337
    %v625 = vpack.c.bf16 %v484, %v435
    %v626 = vpack.c.bf16 %v582, %v533
    %v627 = vpack.c.bf16 %v291, %v242
    %v628 = vpack.c.bf16 %v389, %v340
    %v629 = vpack.c.bf16 %v487, %v438
    %v630 = vpack.c.bf16 %v585, %v536
    %v631 = vpack.c.bf16 %v293, %v244
    %v632 = vpack.c.bf16 %v391, %v342
    %v633 = vpack.c.bf16 %v489, %v440
    %v634 = vpack.c.bf16 %v587, %v538
    %v635 = vpack.c.bf16 %v296, %v247
    %v636 = vpack.c.bf16 %v394, %v345
    %v637 = vpack.c.bf16 %v492, %v443
    %v638 = vpack.c.bf16 %v590, %v541
    %v639 = vpack.c.bf16 %v298, %v249
    %v640 = vpack.c.bf16 %v396, %v347
    %v641 = vpack.c.bf16 %v494, %v445
    %v642 = vpack.c.bf16 %v592, %v543
    %v643 = vpack.c.bf16 %v301, %v252
    %v644 = vpack.c.bf16 %v399, %v350
    %v645 = vpack.c.bf16 %v497, %v448
    %v646 = vpack.c.bf16 %v595, %v546
    %v647 = vpack.c.bf16 %v303, %v254
    %v648 = vpack.c.bf16 %v401, %v352
    %v649 = vpack.c.bf16 %v499, %v450
    %v650 = vpack.c.bf16 %v597, %v548
    %v651 = vpack.c.bf16 %v306, %v257
    %v652 = vpack.c.bf16 %v404, %v355
    %v653 = vpack.c.bf16 %v502, %v453
    %v654 = vpack.c.bf16 %v600, %v551
    %v655 = vpack.c.bf16 %v308, %v259
    %v656 = vpack.c.bf16 %v406, %v357
    %v657 = vpack.c.bf16 %v504, %v455
    %v658 = vpack.c.bf16 %v602, %v553
    %v659 = vpack.c.bf16 %v311, %v262
    %v660 = vpack.c.bf16 %v409, %v360
    %v661 = vpack.c.bf16 %v507, %v458
    %v662 = vpack.c.bf16 %v605, %v556
    %v663 = vpack.c.bf16 %v313, %v264
    %v664 = vpack.c.bf16 %v411, %v362
    %v665 = vpack.c.bf16 %v509, %v460
    %v666 = vpack.c.bf16 %v607, %v558
    %v667 = vpack.c.bf16 %v316, %v267
    %v668 = vpack.c.bf16 %v414, %v365
    %v669 = vpack.c.bf16 %v512, %v463
    %v670 = vpack.c.bf16 %v610, %v561
    %v671 = vpack.c.bf16 %v318, %v269
    %v672 = vpack.c.bf16 %v416, %v367
    %v673 = vpack.c.bf16 %v514, %v465
    %v674 = vpack.c.bf16 %v612, %v563
    %v675 = vpack.c.bf16 %v321, %v272
    %v676 = vpack.c.bf16 %v419, %v370
    %v677 = vpack.c.bf16 %v517, %v468
    %v678 = vpack.c.bf16 %v615, %v566
    %v679 = vpack.c.bf16 %v323, %v274
    %v680 = vpack.c.bf16 %v421, %v372
    %v681 = vpack.c.bf16 %v519, %v470
    %v682 = vpack.c.bf16 %v617, %v568
    %683 = vst [vmem:[#allocation5] sm:$0xff] %v619
    %684 = vst [vmem:[#allocation5 + $0x8] sm:$0xff] %v620
    %685 = vst [vmem:[#allocation5 + $0x10] sm:$0xff] %v621
    %686 = vst [vmem:[#allocation5 + $0x18] sm:$0xff] %v622
    %687 = vst [vmem:[#allocation5 + $0x20] sm:$0xff] %v623
    %688 = vst [vmem:[#allocation5 + $0x28] sm:$0xff] %v624
    %689 = vst [vmem:[#allocation5 + $0x30] sm:$0xff] %v625
    %690 = vst [vmem:[#allocation5 + $0x38] sm:$0xff] %v626
    %691 = vst [vmem:[#allocation5 + $0x40] sm:$0xff] %v627
    %692 = vst [vmem:[#allocation5 + $0x48] sm:$0xff] %v628
    %693 = vst [vmem:[#allocation5 + $0x50] sm:$0xff] %v629
    %694 = vst [vmem:[#allocation5 + $0x58] sm:$0xff] %v630
    %695 = vst [vmem:[#allocation5 + $0x60] sm:$0xff] %v631
    %696 = vst [vmem:[#allocation5 + $0x68] sm:$0xff] %v632
    %697 = vst [vmem:[#allocation5 + $0x70] sm:$0xff] %v633
    %698 = vst [vmem:[#allocation5 + $0x78] sm:$0xff] %v634
    %699 = vst [vmem:[#allocation5 + $0x80] sm:$0xff] %v635
    %700 = vst [vmem:[#allocation5 + $0x88] sm:$0xff] %v636
    %701 = vst [vmem:[#allocation5 + $0x90] sm:$0xff] %v637
    %702 = vst [vmem:[#allocation5 + $0x98] sm:$0xff] %v638
    %703 = vst [vmem:[#allocation5 + $0xa0] sm:$0xff] %v639
    %704 = vst [vmem:[#allocation5 + $0xa8] sm:$0xff] %v640
    %705 = vst [vmem:[#allocation5 + $0xb0] sm:$0xff] %v641
    %706 = vst [vmem:[#allocation5 + $0xb8] sm:$0xff] %v642
    %707 = vst [vmem:[#allocation5 + $0xc0] sm:$0xff] %v643
    %708 = vst [vmem:[#allocation5 + $0xc8] sm:$0xff] %v644
    %709 = vst [vmem:[#allocation5 + $0xd0] sm:$0xff] %v645
    %710 = vst [vmem:[#allocation5 + $0xd8] sm:$0xff] %v646
    %711 = vst [vmem:[#allocation5 + $0xe0] sm:$0xff] %v647
    %712 = vst [vmem:[#allocation5 + $0xe8] sm:$0xff] %v648
    %713 = vst [vmem:[#allocation5 + $0xf0] sm:$0xff] %v649
    %714 = vst [vmem:[#allocation5 + $0xf8] sm:$0xff] %v650
    %715 = vst [vmem:[#allocation5 + $0x100] sm:$0xff] %v651
    %716 = vst [vmem:[#allocation5 + $0x108] sm:$0xff] %v652
    %717 = vst [vmem:[#allocation5 + $0x110] sm:$0xff] %v653
    %718 = vst [vmem:[#allocation5 + $0x118] sm:$0xff] %v654
    %719 = vst [vmem:[#allocation5 + $0x120] sm:$0xff] %v655
    %720 = vst [vmem:[#allocation5 + $0x128] sm:$0xff] %v656
    %721 = vst [vmem:[#allocation5 + $0x130] sm:$0xff] %v657
    %722 = vst [vmem:[#allocation5 + $0x138] sm:$0xff] %v658
    %723 = vst [vmem:[#allocation5 + $0x140] sm:$0xff] %v659
    %724 = vst [vmem:[#allocation5 + $0x148] sm:$0xff] %v660
    %725 = vst [vmem:[#allocation5 + $0x150] sm:$0xff] %v661
    %726 = vst [vmem:[#allocation5 + $0x158] sm:$0xff] %v662
    %727 = vst [vmem:[#allocation5 + $0x160] sm:$0xff] %v663
    %728 = vst [vmem:[#allocation5 + $0x168] sm:$0xff] %v664
    %729 = vst [vmem:[#allocation5 + $0x170] sm:$0xff] %v665
    %730 = vst [vmem:[#allocation5 + $0x178] sm:$0xff] %v666
    %731 = vst [vmem:[#allocation5 + $0x180] sm:$0xff] %v667
    %732 = vst [vmem:[#allocation5 + $0x188] sm:$0xff] %v668
    %733 = vst [vmem:[#allocation5 + $0x190] sm:$0xff] %v669
    %734 = vst [vmem:[#allocation5 + $0x198] sm:$0xff] %v670
    %735 = vst [vmem:[#allocation5 + $0x1a0] sm:$0xff] %v671
    %736 = vst [vmem:[#allocation5 + $0x1a8] sm:$0xff] %v672
    %737 = vst [vmem:[#allocation5 + $0x1b0] sm:$0xff] %v673
    %738 = vst [vmem:[#allocation5 + $0x1b8] sm:$0xff] %v674
    %739 = vst [vmem:[#allocation5 + $0x1c0] sm:$0xff] %v675
    %740 = vst [vmem:[#allocation5 + $0x1c8] sm:$0xff] %v676
    %741 = vst [vmem:[#allocation5 + $0x1d0] sm:$0xff] %v677
    %742 = vst [vmem:[#allocation5 + $0x1d8] sm:$0xff] %v678
    %743 = vst [vmem:[#allocation5 + $0x1e0] sm:$0xff] %v679
    %744 = vst [vmem:[#allocation5 + $0x1e8] sm:$0xff] %v680
    %745 = vst [vmem:[#allocation5 + $0x1f0] sm:$0xff] %v681
    %746 = vst [vmem:[#allocation5 + $0x1f8] sm:$0xff] %v682
    // Predicated region
    $region18: #{tpu_custom_call.1} parent=1 // pred_check
      _
    $region19: #{tpu_custom_call.1} parent=1 // pred_check_branch
      %748 = sbr.rel (0) target = $region21
    $region20: #{tpu_custom_call.1} parent=1 // pred_region
      %750 = vsyncadd [#allocation4], 0
      %s751 = sshll.u32 [#allocation5], 4
      %s752 = int_to_ptr.vmem [resolvable:$true] %s751
      %s753 = sshll.u32 %s3, 4
      %s754 = int_to_ptr.hbm [resolvable:$true] %s753
      %759 = dma.vmem_to_hbm [thread:$0]  %s752, 8192, %s754, [#allocation4], 512, 512, 32
    $region21: #{tpu_custom_call.1} parent=1 // pred_fallthru
      _
    // Predicated region
    $region22: #{tpu_custom_call.1} parent=1 // pred_check
      _
    $region23: #{tpu_custom_call.1} parent=1 // pred_check_branch
      %761 = sbr.rel (0) target = $region25
    $region24: #{tpu_custom_call.1} parent=1 // pred_region
      %763 = dma.done [#allocation4], 8192
    $region25: #{tpu_custom_call.1} parent=1 // pred_fallthru
      _
    %764 = vsyncpa [#allocation3], 1
    %765 = vsyncpa [#allocation4], 1

</llo_original>
